<compile_context>
chip_gen: v5e
topology: v5e:2x2
jax: 0.10.0
libtpu: 0.0.40
codegen_flags: <defaults>
</compile_context>

<pallas_src>
import math

import jax
import jax.numpy as jnp
from jax.experimental import pallas as pl
from jax.experimental.pallas import tpu as pltpu


def _elu(x):
    # F.elu with default alpha=1.0: x if x > 0 else exp(x) - 1.
    return jnp.where(x > 0, x, jnp.exp(x) - 1.0)


def _round_up(x, m):
    return ((x + m - 1) // m) * m


def statistics_net_kernel(z_ref, w1_ref, b1_ref, w2_ref, b2_ref, w3_ref, b3_ref,
                          out_ref):
    """One batch tile of the fused 3-layer MLP: (TB,2) -> (TB,H) -> (TB,H) -> (TB,1)."""
    z = z_ref[...]            # (TB, F_in) f32
    w1 = w1_ref[...]          # (F_in, H)
    f_in = z.shape[1]

    # fc1 + ELU: K is tiny (2) -> VPU broadcast multiply-adds, keep the MXU free.
    h1 = z[:, 0:1] * w1[0:1, :]
    for f in range(1, f_in):                        # trace-time loop, F_in == 2 here
        h1 = h1 + z[:, f:f + 1] * w1[f:f + 1, :]
    h1 = _elu(h1 + b1_ref[...])

    # fc2 + ELU: the only real matmul -> MXU with f32 accumulate.
    h2 = jnp.dot(h1, w2_ref[...], preferred_element_type=jnp.float32) + b2_ref[...]
    h2 = _elu(h2)

    # fc3 (no activation): N=1 -> VPU multiply + lane reduction (w3 is (1, H)).
    h3 = jnp.sum(h2 * w3_ref[...], axis=-1, keepdims=True) + b3_ref[...]
    out_ref[...] = h3.astype(out_ref.dtype)


def statistics_net_forward(z, w1, b1, w2, b2, w3, b3, *, tb=256):
    """z: (B, xdim+ydim) float32. Returns (B, 1) float32.

    Weights: w1 (in,H), b1 (1,H), w2 (H,H), b2 (1,H), w3 (1,H), b3 (1,1).
    """
    B, F_in = z.shape
    H = w1.shape[1]

    # Batch tile: multiple of 8 (f32 sublane); default 256 for MXU M-alignment.
    TB = min(_round_up(tb, 8), _round_up(B, 8))
    B_pad = _round_up(B, TB)
    if B_pad != B:
        z = jnp.pad(z, ((0, B_pad - B), (0, 0)))
    grid = (B_pad // TB,)

    const = lambda i: (0, 0)   # weights/biases: same block every step -> resident in VMEM

    out = pl.pallas_call(
        statistics_net_kernel,
        out_shape=jax.ShapeDtypeStruct((B_pad, 1), jnp.float32),
        grid=grid,
        in_specs=[
            pl.BlockSpec((TB, F_in), lambda i: (i, 0)),   # z: batch-tiled
            pl.BlockSpec((F_in, H), const),               # w1
            pl.BlockSpec((1, H), const),                  # b1
            pl.BlockSpec((H, H), const),                  # w2 (dominant ~1 MiB, DMA'd once)
            pl.BlockSpec((1, H), const),                  # b2
            pl.BlockSpec((1, H), const),                  # w3 (lane-dense)
            pl.BlockSpec((1, 1), const),                  # b3
        ],
        out_specs=pl.BlockSpec((TB, 1), lambda i: (i, 0)),
        compiler_params=pltpu.CompilerParams(
            dimension_semantics=("parallel",)),
    )(z, w1, b1, w2, b2, w3, b3)

    return out[:B]


def init_params(key, xdim=1, ydim=1, H=512):
    """Deterministic init matching PyTorch nn.Linear default (U[-1/sqrt(fan_in), +])."""
    in_dim = xdim + ydim
    keys = jax.random.split(key, 6)

    def linear(kw, kb, fan_in, fan_out, w_shape):
        bound = 1.0 / math.sqrt(fan_in)
        w = jax.random.uniform(kw, w_shape, jnp.float32, -bound, bound)
        b = jax.random.uniform(kb, (1, fan_out), jnp.float32, -bound, bound)
        return w, b

    w1, b1 = linear(keys[0], keys[1], in_dim, H, (in_dim, H))
    w2, b2 = linear(keys[2], keys[3], H, H, (H, H))
    w3, b3 = linear(keys[4], keys[5], H, 1, (1, H))   # fc3 weight kept lane-dense (1, H)
    return w1, b1, w2, b2, w3, b3


def _reference(z, params):
    w1, b1, w2, b2, w3, b3 = params
    h1 = jax.nn.elu(z @ w1 + b1)
    h2 = jax.nn.elu(h1 @ w2 + b2)
    return h2 @ w3.T + b3


if __name__ == "__main__":
    key = jax.random.PRNGKey(0)
    k_params, k_in1, k_in2 = jax.random.split(key, 3)

    xdim, ydim, H = 1, 1, 512
    params = init_params(k_params, xdim=xdim, ydim=ydim, H=H)

    # Case 1: tiny batch (single grid step, TB clamps to 8).
    batch = 8
    z = jax.random.normal(k_in1, (batch, xdim + ydim), dtype=jnp.float32)
    out = jax.block_until_ready(statistics_net_forward(z, *params))
    ref = _reference(z, params)
    assert out.shape == (batch, 1)
    assert jnp.allclose(out, ref, atol=1e-4, rtol=1e-4)

    # Case 2: non-multiple batch with a small tile to exercise the multi-step grid,
    # resident-weight index_maps and the pad/slice path (20 rows, TB=8 -> 3 steps).
    batch2 = 20
    z2 = jax.random.normal(k_in2, (batch2, xdim + ydim), dtype=jnp.float32)
    out2 = jax.block_until_ready(statistics_net_forward(z2, *params, tb=8))
    ref2 = _reference(z2, params)
    assert out2.shape == (batch2, 1)
    assert jnp.allclose(out2, ref2, atol=1e-4, rtol=1e-4)

    print("KERNEL_OK")
</pallas_src>

<mosaic_0001>
module attributes {stable_mosaic.version = 11 : i64} {
  func.func @statistics_net_kernel(%arg0: i32, %arg1: memref<8x2xf32, #tpu.memory_space<vmem>>, %arg2: memref<2x512xf32, #tpu.memory_space<vmem>>, %arg3: memref<1x512xf32, #tpu.memory_space<vmem>>, %arg4: memref<512x512xf32, #tpu.memory_space<vmem>>, %arg5: memref<1x512xf32, #tpu.memory_space<vmem>>, %arg6: memref<1x512xf32, #tpu.memory_space<vmem>>, %arg7: memref<1x1xf32, #tpu.memory_space<vmem>>, %arg8: memref<8x1xf32, #tpu.memory_space<vmem>>) attributes {dimension_semantics = [#tpu.dimension_semantics<parallel>], iteration_bounds = array<i64: 1>, scalar_prefetch = 0 : i64, scratch_operands = 0 : i64, tpu.core_type = #tpu.core_type<tc>, window_params = [{transform_indices = @transform_0, window_bounds = array<i64: 8, 2>}, {pipeline_mode = #tpu.pipeline_mode<synchronous>, transform_indices = @transform_1, window_bounds = array<i64: 2, 512>}, {pipeline_mode = #tpu.pipeline_mode<synchronous>, transform_indices = @transform_2, window_bounds = array<i64: 1, 512>}, {pipeline_mode = #tpu.pipeline_mode<synchronous>, transform_indices = @transform_3, window_bounds = array<i64: 512, 512>}, {pipeline_mode = #tpu.pipeline_mode<synchronous>, transform_indices = @transform_4, window_bounds = array<i64: 1, 512>}, {pipeline_mode = #tpu.pipeline_mode<synchronous>, transform_indices = @transform_5, window_bounds = array<i64: 1, 512>}, {pipeline_mode = #tpu.pipeline_mode<synchronous>, transform_indices = @transform_6, window_bounds = array<i64: 1, 1>}, {transform_indices = @transform_7, window_bounds = array<i64: 8, 1>}]} {
    %c0 = arith.constant 0 : index
    %c0_0 = arith.constant 0 : index
    %0 = vector.load %arg1[%c0, %c0_0] : memref<8x2xf32, #tpu.memory_space<vmem>>, vector<8x2xf32>
    %c0_1 = arith.constant 0 : index
    %c0_2 = arith.constant 0 : index
    %1 = vector.load %arg2[%c0_1, %c0_2] : memref<2x512xf32, #tpu.memory_space<vmem>>, vector<2x512xf32>
    %2 = vector.extract_strided_slice %0 {offsets = [0, 0], sizes = [8, 1], strides = [1, 1]} : vector<8x2xf32> to vector<8x1xf32>
    %3 = vector.extract_strided_slice %1 {offsets = [0, 0], sizes = [1, 512], strides = [1, 1]} : vector<2x512xf32> to vector<1x512xf32>
    %4 = vector.broadcast %2 : vector<8x1xf32> to vector<8x512xf32>
    %5 = vector.broadcast %3 : vector<1x512xf32> to vector<8x512xf32>
    %6 = arith.mulf %4, %5 : vector<8x512xf32>
    %7 = vector.extract_strided_slice %0 {offsets = [0, 1], sizes = [8, 1], strides = [1, 1]} : vector<8x2xf32> to vector<8x1xf32>
    %8 = vector.extract_strided_slice %1 {offsets = [1, 0], sizes = [1, 512], strides = [1, 1]} : vector<2x512xf32> to vector<1x512xf32>
    %9 = vector.broadcast %7 : vector<8x1xf32> to vector<8x512xf32>
    %10 = vector.broadcast %8 : vector<1x512xf32> to vector<8x512xf32>
    %11 = arith.mulf %9, %10 : vector<8x512xf32>
    %12 = arith.addf %6, %11 : vector<8x512xf32>
    %c0_3 = arith.constant 0 : index
    %c0_4 = arith.constant 0 : index
    %13 = vector.load %arg3[%c0_3, %c0_4] : memref<1x512xf32, #tpu.memory_space<vmem>>, vector<1x512xf32>
    %14 = vector.broadcast %13 : vector<1x512xf32> to vector<8x512xf32>
    %15 = arith.addf %12, %14 : vector<8x512xf32>
    %cst = arith.constant 0.000000e+00 : f32
    %16 = vector.broadcast %cst : f32 to vector<8x512xf32>
    %17 = arith.cmpf ogt, %15, %16 : vector<8x512xf32>
    %18 = math.exp %15 : vector<8x512xf32>
    %cst_5 = arith.constant 1.000000e+00 : f32
    %19 = vector.broadcast %cst_5 : f32 to vector<8x512xf32>
    %20 = arith.subf %18, %19 : vector<8x512xf32>
    %21 = arith.select %17, %15, %20 : vector<8x512xi1>, vector<8x512xf32>
    %c0_6 = arith.constant 0 : index
    %c0_7 = arith.constant 0 : index
    %22 = vector.load %arg4[%c0_6, %c0_7] : memref<512x512xf32, #tpu.memory_space<vmem>>, vector<512x512xf32>
    %cst_8 = arith.constant dense<0.000000e+00> : vector<8x512xf32>
    %23 = tpu.matmul %21, %22, %cst_8 {dimension_numbers = #tpu.dot_dimension_numbers<[1], [0], [0], [1], [0, 0, 1, 1], [], []>} : vector<8x512xf32>, vector<512x512xf32>, vector<8x512xf32> -> vector<8x512xf32>
    %c0_9 = arith.constant 0 : index
    %c0_10 = arith.constant 0 : index
    %24 = vector.load %arg5[%c0_9, %c0_10] : memref<1x512xf32, #tpu.memory_space<vmem>>, vector<1x512xf32>
    %25 = vector.broadcast %24 : vector<1x512xf32> to vector<8x512xf32>
    %26 = arith.addf %23, %25 : vector<8x512xf32>
    %cst_11 = arith.constant 0.000000e+00 : f32
    %27 = vector.broadcast %cst_11 : f32 to vector<8x512xf32>
    %28 = arith.cmpf ogt, %26, %27 : vector<8x512xf32>
    %29 = math.exp %26 : vector<8x512xf32>
    %cst_12 = arith.constant 1.000000e+00 : f32
    %30 = vector.broadcast %cst_12 : f32 to vector<8x512xf32>
    %31 = arith.subf %29, %30 : vector<8x512xf32>
    %32 = arith.select %28, %26, %31 : vector<8x512xi1>, vector<8x512xf32>
    %c0_13 = arith.constant 0 : index
    %c0_14 = arith.constant 0 : index
    %33 = vector.load %arg6[%c0_13, %c0_14] : memref<1x512xf32, #tpu.memory_space<vmem>>, vector<1x512xf32>
    %34 = vector.broadcast %33 : vector<1x512xf32> to vector<8x512xf32>
    %35 = arith.mulf %32, %34 : vector<8x512xf32>
    %cst_15 = arith.constant dense<0.000000e+00> : vector<8xf32>
    %36 = vector.multi_reduction <add>, %35, %cst_15 [1] : vector<8x512xf32> to vector<8xf32>
    %37 = vector.shape_cast %36 : vector<8xf32> to vector<8x1xf32>
    %c0_16 = arith.constant 0 : index
    %c0_17 = arith.constant 0 : index
    %38 = vector.load %arg7[%c0_16, %c0_17] : memref<1x1xf32, #tpu.memory_space<vmem>>, vector<1x1xf32>
    %39 = vector.broadcast %38 : vector<1x1xf32> to vector<8x1xf32>
    %40 = arith.addf %37, %39 : vector<8x1xf32>
    %c0_18 = arith.constant 0 : index
    %c0_19 = arith.constant 0 : index
    %41 = vector.load %arg8[%c0_18, %c0_19] : memref<8x1xf32, #tpu.memory_space<vmem>>, vector<8x1xf32>
    tpu.vector_store %arg8[%c0_18, %c0_19], %40 {strides = array<i32>} : memref<8x1xf32, #tpu.memory_space<vmem>>, vector<8x1xf32>,
    return
  }
  func.func @transform_0(%arg0: i32) -> (i32, i32) {
    %c0_i32 = arith.constant 0 : i32
    %c0_i32_0 = arith.constant 0 : i32
    return %arg0, %c0_i32 : i32, i32
  }
  func.func @transform_1(%arg0: i32) -> (i32, i32) {
    %c0_i32 = arith.constant 0 : i32
    %c0_i32_0 = arith.constant 0 : i32
    %c0_i32_1 = arith.constant 0 : i32
    return %c0_i32, %c0_i32_0 : i32, i32
  }
  func.func @transform_2(%arg0: i32) -> (i32, i32) {
    %c0_i32 = arith.constant 0 : i32
    %c0_i32_0 = arith.constant 0 : i32
    %c0_i32_1 = arith.constant 0 : i32
    return %c0_i32, %c0_i32_0 : i32, i32
  }
  func.func @transform_3(%arg0: i32) -> (i32, i32) {
    %c0_i32 = arith.constant 0 : i32
    %c0_i32_0 = arith.constant 0 : i32
    %c0_i32_1 = arith.constant 0 : i32
    return %c0_i32, %c0_i32_0 : i32, i32
  }
  func.func @transform_4(%arg0: i32) -> (i32, i32) {
    %c0_i32 = arith.constant 0 : i32
    %c0_i32_0 = arith.constant 0 : i32
    %c0_i32_1 = arith.constant 0 : i32
    return %c0_i32, %c0_i32_0 : i32, i32
  }
  func.func @transform_5(%arg0: i32) -> (i32, i32) {
    %c0_i32 = arith.constant 0 : i32
    %c0_i32_0 = arith.constant 0 : i32
    %c0_i32_1 = arith.constant 0 : i32
    return %c0_i32, %c0_i32_0 : i32, i32
  }
  func.func @transform_6(%arg0: i32) -> (i32, i32) {
    %c0_i32 = arith.constant 0 : i32
    %c0_i32_0 = arith.constant 0 : i32
    %c0_i32_1 = arith.constant 0 : i32
    return %c0_i32, %c0_i32_0 : i32, i32
  }
  func.func @transform_7(%arg0: i32) -> (i32, i32) {
    %c0_i32 = arith.constant 0 : i32
    %c0_i32_0 = arith.constant 0 : i32
    return %arg0, %c0_i32 : i32, i32
  }
}

</mosaic_0001>

<llo_original>
// kernel: tpu_custom_call.1
$region0: #{tpu_custom_call.1}
  #allocation0 [shape = 'u32[]', space=smem, size = 0x4, offset = 0x4, fixed_abs, tag = 'smem constant byte address 0x4 - core index']
  #allocation1 [shape = 'u32[72,128]{1,0:T(1,128)}', space=vmem, size = 0x9000, scoped, tag = 'internal scratch']
  #allocation2 [shape = 'f32[1,1]{1,0:T(1,128)S(1)}', space=vmem, size = 0x200, scoped, tag = 'scoped memory for tpu_custom_call.1']
  %s0 = inlined_call_operand.vmem [shape: f32[8,2], index: 0, kind: input, shape index: {}]
  %s1 = inlined_call_operand.vmem [shape: f32[2,512], index: 1, kind: input, shape index: {}]
  %s2 = inlined_call_operand.hbm [shape: f32[1,512], index: 2, kind: input, shape index: {}]
  %s3 = inlined_call_operand.hbm [shape: f32[512,512], index: 3, kind: input, shape index: {}]
  %s4 = inlined_call_operand.hbm [shape: f32[1,512], index: 4, kind: input, shape index: {}]
  %s5 = inlined_call_operand.vmem [shape: f32[1,512], index: 5, kind: input, shape index: {}]
  %s6 = inlined_call_operand.<no memory space> [shape: f32[1,1], index: 6, kind: input, shape index: {}]
  %s7 = inlined_call_operand.vmem [shape: f32[8,1], index: 7, kind: output, shape index: {}]
  %s8 = sld [smem:[#allocation0]]
  $region50: #{tpu_custom_call.1} parent=0
    _
  %s10 = ssub.s32 1, %s8
  %s11 = scalar_select 0, %s10, %s8
  %v12 = vstv %s6
  %13 = vst [vmem:[#allocation2] sm:$0x1] %v12
  $region1: #{tpu_custom_call.1} parent=0
    #allocation3 [shape = 'u8[2048]{0}', space=vmem, size = 0x800, scoped, tag = 'input window, operand 2, single buffered']
    #allocation4 [shape = 's32[1]{0}', space=sflag, size = 0x4, scoped, tag = 'scoped memory for tpu_custom_call.1']
    #allocation5 [shape = 'u8[1048576]{0}', space=vmem, size = 0x100000, scoped, tag = 'input window, operand 3, single buffered']
    #allocation6 [shape = 's32[1]{0}', space=sflag, size = 0x4, scoped, tag = 'scoped memory for tpu_custom_call.1']
    #allocation7 [shape = 'u8[2048]{0}', space=vmem, size = 0x800, scoped, tag = 'input window, operand 4, single buffered']
    %14 = vsyncpa [#allocation4], 0
    %15 = vsyncpa [#allocation6], 0
    // Predicated region
    $region2: #{tpu_custom_call.1} parent=1 // pred_check
      _
    $region3: #{tpu_custom_call.1} parent=1 // pred_check_branch
      %17 = sbr.rel (0) target = $region5
    $region4: #{tpu_custom_call.1} parent=1 // pred_region
      _
    $region5: #{tpu_custom_call.1} parent=1 // pred_fallthru
      _
    // Predicated region
    $region6: #{tpu_custom_call.1} parent=1 // pred_check
      _
    $region7: #{tpu_custom_call.1} parent=1 // pred_check_branch
      %19 = sbr.rel (0) target = $region9
    $region8: #{tpu_custom_call.1} parent=1 // pred_region
      _
    $region9: #{tpu_custom_call.1} parent=1 // pred_fallthru
      _
    // Predicated region
    $region10: #{tpu_custom_call.1} parent=1 // pred_check
      _
    $region11: #{tpu_custom_call.1} parent=1 // pred_check_branch
      %21 = sbr.rel (0) target = $region13
    $region12: #{tpu_custom_call.1} parent=1 // pred_region
      %23 = vsyncadd [#allocation4], 0
      %s25 = sshll.u32 %s2, 4
      %s26 = int_to_ptr.hbm [resolvable:$true] %s25
      %s27 = sshll.u32 [#allocation3], 4
      %s28 = int_to_ptr.vmem [resolvable:$true] %s27
      %30 = dma.hbm_to_vmem [thread:$0]  %s26, 64, %s28, [#allocation4]
    $region13: #{tpu_custom_call.1} parent=1 // pred_fallthru
      _
    // Predicated region
    $region14: #{tpu_custom_call.1} parent=1 // pred_check
      _
    $region15: #{tpu_custom_call.1} parent=1 // pred_check_branch
      %32 = sbr.rel (0) target = $region17
    $region16: #{tpu_custom_call.1} parent=1 // pred_region
      %34 = vsyncadd [#allocation6], 0
      %s35 = sshll.u32 %s3, 4
      %s36 = int_to_ptr.hbm [resolvable:$true] %s35
      %s37 = sshll.u32 [#allocation5], 4
      %s38 = int_to_ptr.vmem [resolvable:$true] %s37
      %43 = dma.hbm_to_vmem [thread:$0]  %s36, 32768, %s38, [#allocation6], 512, 512, 32
    $region17: #{tpu_custom_call.1} parent=1 // pred_fallthru
      _
    // Predicated region
    $region18: #{tpu_custom_call.1} parent=1 // pred_check
      _
    $region19: #{tpu_custom_call.1} parent=1 // pred_check_branch
      %45 = sbr.rel (0) target = $region21
    $region20: #{tpu_custom_call.1} parent=1 // pred_region
      %47 = vsyncadd [#allocation6], 0
      %s49 = sshll.u32 %s4, 4
      %s50 = int_to_ptr.hbm [resolvable:$true] %s49
      %s51 = sshll.u32 [#allocation7], 4
      %s52 = int_to_ptr.vmem [resolvable:$true] %s51
      %54 = dma.hbm_to_vmem [thread:$0]  %s50, 64, %s52, [#allocation6]
    $region21: #{tpu_custom_call.1} parent=1 // pred_fallthru
      _
    // Predicated region
    $region22: #{tpu_custom_call.1} parent=1 // pred_check
      _
    $region23: #{tpu_custom_call.1} parent=1 // pred_check_branch
      %56 = sbr.rel (0) target = $region25
    $region24: #{tpu_custom_call.1} parent=1 // pred_region
      _
    $region25: #{tpu_custom_call.1} parent=1 // pred_fallthru
      _
    // Predicated region
    $region26: #{tpu_custom_call.1} parent=1 // pred_check
      _
    $region27: #{tpu_custom_call.1} parent=1 // pred_check_branch
      %58 = sbr.rel (0) target = $region29
    $region28: #{tpu_custom_call.1} parent=1 // pred_region
      _
    $region29: #{tpu_custom_call.1} parent=1 // pred_fallthru
      _
    // Predicated region
    $region30: #{tpu_custom_call.1} parent=1 // pred_check
      _
    $region31: #{tpu_custom_call.1} parent=1 // pred_check_branch
      %60 = sbr.rel (0) target = $region33
    $region32: #{tpu_custom_call.1} parent=1 // pred_region
      %62 = dma.done [#allocation4], 64
    $region33: #{tpu_custom_call.1} parent=1 // pred_fallthru
      _
    // Predicated region
    $region34: #{tpu_custom_call.1} parent=1 // pred_check
      _
    $region35: #{tpu_custom_call.1} parent=1 // pred_check_branch
      %64 = sbr.rel (0) target = $region37
    $region36: #{tpu_custom_call.1} parent=1 // pred_region
      %66 = dma.done [#allocation6], 32768
    $region37: #{tpu_custom_call.1} parent=1 // pred_fallthru
      _
    // Predicated region
    $region38: #{tpu_custom_call.1} parent=1 // pred_check
      _
    $region39: #{tpu_custom_call.1} parent=1 // pred_check_branch
      %68 = sbr.rel (0) target = $region41
    $region40: #{tpu_custom_call.1} parent=1 // pred_region
      %70 = dma.done [#allocation6], 64
    $region41: #{tpu_custom_call.1} parent=1 // pred_fallthru
      _
    %v71 = vld [vmem:[%s0] sm:$0xff]
    %v72 = vld [vmem:[%s1] sm:$0xff]
    %74 = vset.pattern.permute.xlu0 0
    %75 = vperm.xlu0 %74, %v71
    %v76 = vpop.permute.xlu0 %75
    %v79 = vperm.slane %v72, 0
    %v80 = vperm.slane %v72, 2
    %v81 = vperm.slane %v72, 4
    %v82 = vperm.slane %v72, 6
    %v87 = vperm.slane %v79, 0
    %v88 = vperm.slane %v80, 0
    %v89 = vperm.slane %v81, 0
    %v90 = vperm.slane %v82, 0
    %v91 = vmul.f32 %v76, %v87
    %v92 = vmul.f32 %v76, %v88
    %v93 = vmul.f32 %v76, %v89
    %v94 = vmul.f32 %v76, %v90
    %95 = vset.pattern.permute.xlu0 1
    %96 = vperm.xlu0 %95, %v71
    %v97 = vpop.permute.xlu0 %96
    %v99 = vperm.slane %v72, 1
    %v100 = vperm.slane %v72, 3
    %v101 = vperm.slane %v72, 5
    %v102 = vperm.slane %v72, 7
    %v107 = vperm.slane %v99, 1
    %v108 = vperm.slane %v100, 1
    %v109 = vperm.slane %v101, 1
    %v110 = vperm.slane %v102, 1
    %v111 = vmul.f32 %v97, %v107
    %v112 = vmul.f32 %v97, %v108
    %v113 = vmul.f32 %v97, %v109
    %v114 = vmul.f32 %v97, %v110
    %v115 = vadd.f32 %v91, %v111
    %v116 = vadd.f32 %v92, %v112
    %v117 = vadd.f32 %v93, %v113
    %v118 = vadd.f32 %v94, %v114
    %v119 = vld [vmem:[#allocation3] sm:$0xf]
    %v121 = vperm.slane %v119, 0
    %v122 = vperm.slane %v119, 1
    %v123 = vperm.slane %v119, 2
    %v124 = vperm.slane %v119, 3
    %v129 = vadd.f32 %v115, %v121
    %v130 = vadd.f32 %v116, %v122
    %v131 = vadd.f32 %v117, %v123
    %v132 = vadd.f32 %v118, %v124
    %vm133 = vcmp.gt.f32.partialorder %v129, 0.0
    %vm134 = vcmp.gt.f32.partialorder %v130, 0.0
    %vm135 = vcmp.gt.f32.partialorder %v131, 0.0
    %vm136 = vcmp.gt.f32.partialorder %v132, 0.0
    %v137 = vmul.f32 %v129, 1.442695
    %v138 = vpow.pop %v137
    %v139 = vmul.f32 %v130, 1.442695
    %v140 = vpow.pop %v139
    %v141 = vmul.f32 %v131, 1.442695
    %v142 = vpow.pop %v141
    %v143 = vmul.f32 %v132, 1.442695
    %v144 = vpow.pop %v143
    %v145 = vsub.f32 %v138, 1.0
    %v146 = vsub.f32 %v140, 1.0
    %v147 = vsub.f32 %v142, 1.0
    %v148 = vsub.f32 %v144, 1.0
    %v149 = vsel %vm133, %v129, %v145
    %v150 = vsel %vm134, %v130, %v146
    %v151 = vsel %vm135, %v131, %v147
    %v152 = vsel %vm136, %v132, %v148
    %v153 = vld [vmem:[#allocation5] sm:$0xff]
    %v154 = vld [vmem:[#allocation5 + $0x8] sm:$0xff]
    %v155 = vld [vmem:[#allocation5 + $0x10] sm:$0xff]
    %v156 = vld [vmem:[#allocation5 + $0x18] sm:$0xff]
    %v157 = vld [vmem:[#allocation5 + $0x20] sm:$0xff]
    %v158 = vld [vmem:[#allocation5 + $0x28] sm:$0xff]
    %v159 = vld [vmem:[#allocation5 + $0x30] sm:$0xff]
    %v160 = vld [vmem:[#allocation5 + $0x38] sm:$0xff]
    %v161 = vld [vmem:[#allocation5 + $0x40] sm:$0xff]
    %v162 = vld [vmem:[#allocation5 + $0x48] sm:$0xff]
    %v163 = vld [vmem:[#allocation5 + $0x50] sm:$0xff]
    %v164 = vld [vmem:[#allocation5 + $0x58] sm:$0xff]
    %v165 = vld [vmem:[#allocation5 + $0x60] sm:$0xff]
    %v166 = vld [vmem:[#allocation5 + $0x68] sm:$0xff]
    %v167 = vld [vmem:[#allocation5 + $0x70] sm:$0xff]
    %v168 = vld [vmem:[#allocation5 + $0x78] sm:$0xff]
    %v169 = vld [vmem:[#allocation5 + $0x80] sm:$0xff]
    %v170 = vld [vmem:[#allocation5 + $0x88] sm:$0xff]
    %v171 = vld [vmem:[#allocation5 + $0x90] sm:$0xff]
    %v172 = vld [vmem:[#allocation5 + $0x98] sm:$0xff]
    %v173 = vld [vmem:[#allocation5 + $0xa0] sm:$0xff]
    %v174 = vld [vmem:[#allocation5 + $0xa8] sm:$0xff]
    %v175 = vld [vmem:[#allocation5 + $0xb0] sm:$0xff]
    %v176 = vld [vmem:[#allocation5 + $0xb8] sm:$0xff]
    %v177 = vld [vmem:[#allocation5 + $0xc0] sm:$0xff]
    %v178 = vld [vmem:[#allocation5 + $0xc8] sm:$0xff]
    %v179 = vld [vmem:[#allocation5 + $0xd0] sm:$0xff]
    %v180 = vld [vmem:[#allocation5 + $0xd8] sm:$0xff]
    %v181 = vld [vmem:[#allocation5 + $0xe0] sm:$0xff]
    %v182 = vld [vmem:[#allocation5 + $0xe8] sm:$0xff]
    %v183 = vld [vmem:[#allocation5 + $0xf0] sm:$0xff]
    %v184 = vld [vmem:[#allocation5 + $0xf8] sm:$0xff]
    %v185 = vld [vmem:[#allocation5 + $0x100] sm:$0xff]
    %v186 = vld [vmem:[#allocation5 + $0x108] sm:$0xff]
    %v187 = vld [vmem:[#allocation5 + $0x110] sm:$0xff]
    %v188 = vld [vmem:[#allocation5 + $0x118] sm:$0xff]
    %v189 = vld [vmem:[#allocation5 + $0x120] sm:$0xff]
    %v190 = vld [vmem:[#allocation5 + $0x128] sm:$0xff]
    %v191 = vld [vmem:[#allocation5 + $0x130] sm:$0xff]
    %v192 = vld [vmem:[#allocation5 + $0x138] sm:$0xff]
    %v193 = vld [vmem:[#allocation5 + $0x140] sm:$0xff]
    %v194 = vld [vmem:[#allocation5 + $0x148] sm:$0xff]
    %v195 = vld [vmem:[#allocation5 + $0x150] sm:$0xff]
    %v196 = vld [vmem:[#allocation5 + $0x158] sm:$0xff]
    %v197 = vld [vmem:[#allocation5 + $0x160] sm:$0xff]
    %v198 = vld [vmem:[#allocation5 + $0x168] sm:$0xff]
    %v199 = vld [vmem:[#allocation5 + $0x170] sm:$0xff]
    %v200 = vld [vmem:[#allocation5 + $0x178] sm:$0xff]
    %v201 = vld [vmem:[#allocation5 + $0x180] sm:$0xff]
    %v202 = vld [vmem:[#allocation5 + $0x188] sm:$0xff]
    %v203 = vld [vmem:[#allocation5 + $0x190] sm:$0xff]
    %v204 = vld [vmem:[#allocation5 + $0x198] sm:$0xff]
    %v205 = vld [vmem:[#allocation5 + $0x1a0] sm:$0xff]
    %v206 = vld [vmem:[#allocation5 + $0x1a8] sm:$0xff]
    %v207 = vld [vmem:[#allocation5 + $0x1b0] sm:$0xff]
    %v208 = vld [vmem:[#allocation5 + $0x1b8] sm:$0xff]
    %v209 = vld [vmem:[#allocation5 + $0x1c0] sm:$0xff]
    %v210 = vld [vmem:[#allocation5 + $0x1c8] sm:$0xff]
    %v211 = vld [vmem:[#allocation5 + $0x1d0] sm:$0xff]
    %v212 = vld [vmem:[#allocation5 + $0x1d8] sm:$0xff]
    %v213 = vld [vmem:[#allocation5 + $0x1e0] sm:$0xff]
    %v214 = vld [vmem:[#allocation5 + $0x1e8] sm:$0xff]
    %v215 = vld [vmem:[#allocation5 + $0x1f0] sm:$0xff]
    %v216 = vld [vmem:[#allocation5 + $0x1f8] sm:$0xff]
    %v217 = vld [vmem:[#allocation5 + $0x200] sm:$0xff]
    %v218 = vld [vmem:[#allocation5 + $0x208] sm:$0xff]
    %v219 = vld [vmem:[#allocation5 + $0x210] sm:$0xff]
    %v220 = vld [vmem:[#allocation5 + $0x218] sm:$0xff]
    %v221 = vld [vmem:[#allocation5 + $0x220] sm:$0xff]
    %v222 = vld [vmem:[#allocation5 + $0x228] sm:$0xff]
    %v223 = vld [vmem:[#allocation5 + $0x230] sm:$0xff]
    %v224 = vld [vmem:[#allocation5 + $0x238] sm:$0xff]
    %v225 = vld [vmem:[#allocation5 + $0x240] sm:$0xff]
    %v226 = vld [vmem:[#allocation5 + $0x248] sm:$0xff]
    %v227 = vld [vmem:[#allocation5 + $0x250] sm:$0xff]
    %v228 = vld [vmem:[#allocation5 + $0x258] sm:$0xff]
    %v229 = vld [vmem:[#allocation5 + $0x260] sm:$0xff]
    %v230 = vld [vmem:[#allocation5 + $0x268] sm:$0xff]
    %v231 = vld [vmem:[#allocation5 + $0x270] sm:$0xff]
    %v232 = vld [vmem:[#allocation5 + $0x278] sm:$0xff]
    %v233 = vld [vmem:[#allocation5 + $0x280] sm:$0xff]
    %v234 = vld [vmem:[#allocation5 + $0x288] sm:$0xff]
    %v235 = vld [vmem:[#allocation5 + $0x290] sm:$0xff]
    %v236 = vld [vmem:[#allocation5 + $0x298] sm:$0xff]
    %v237 = vld [vmem:[#allocation5 + $0x2a0] sm:$0xff]
    %v238 = vld [vmem:[#allocation5 + $0x2a8] sm:$0xff]
    %v239 = vld [vmem:[#allocation5 + $0x2b0] sm:$0xff]
    %v240 = vld [vmem:[#allocation5 + $0x2b8] sm:$0xff]
    %v241 = vld [vmem:[#allocation5 + $0x2c0] sm:$0xff]
    %v242 = vld [vmem:[#allocation5 + $0x2c8] sm:$0xff]
    %v243 = vld [vmem:[#allocation5 + $0x2d0] sm:$0xff]
    %v244 = vld [vmem:[#allocation5 + $0x2d8] sm:$0xff]
    %v245 = vld [vmem:[#allocation5 + $0x2e0] sm:$0xff]
    %v246 = vld [vmem:[#allocation5 + $0x2e8] sm:$0xff]
    %v247 = vld [vmem:[#allocation5 + $0x2f0] sm:$0xff]
    %v248 = vld [vmem:[#allocation5 + $0x2f8] sm:$0xff]
    %v249 = vld [vmem:[#allocation5 + $0x300] sm:$0xff]
    %v250 = vld [vmem:[#allocation5 + $0x308] sm:$0xff]
    %v251 = vld [vmem:[#allocation5 + $0x310] sm:$0xff]
    %v252 = vld [vmem:[#allocation5 + $0x318] sm:$0xff]
    %v253 = vld [vmem:[#allocation5 + $0x320] sm:$0xff]
    %v254 = vld [vmem:[#allocation5 + $0x328] sm:$0xff]
    %v255 = vld [vmem:[#allocation5 + $0x330] sm:$0xff]
    %v256 = vld [vmem:[#allocation5 + $0x338] sm:$0xff]
    %v257 = vld [vmem:[#allocation5 + $0x340] sm:$0xff]
    %v258 = vld [vmem:[#allocation5 + $0x348] sm:$0xff]
    %v259 = vld [vmem:[#allocation5 + $0x350] sm:$0xff]
    %v260 = vld [vmem:[#allocation5 + $0x358] sm:$0xff]
    %v261 = vld [vmem:[#allocation5 + $0x360] sm:$0xff]
    %v262 = vld [vmem:[#allocation5 + $0x368] sm:$0xff]
    %v263 = vld [vmem:[#allocation5 + $0x370] sm:$0xff]
    %v264 = vld [vmem:[#allocation5 + $0x378] sm:$0xff]
    %v265 = vld [vmem:[#allocation5 + $0x380] sm:$0xff]
    %v266 = vld [vmem:[#allocation5 + $0x388] sm:$0xff]
    %v267 = vld [vmem:[#allocation5 + $0x390] sm:$0xff]
    %v268 = vld [vmem:[#allocation5 + $0x398] sm:$0xff]
    %v269 = vld [vmem:[#allocation5 + $0x3a0] sm:$0xff]
    %v270 = vld [vmem:[#allocation5 + $0x3a8] sm:$0xff]
    %v271 = vld [vmem:[#allocation5 + $0x3b0] sm:$0xff]
    %v272 = vld [vmem:[#allocation5 + $0x3b8] sm:$0xff]
    %v273 = vld [vmem:[#allocation5 + $0x3c0] sm:$0xff]
    %v274 = vld [vmem:[#allocation5 + $0x3c8] sm:$0xff]
    %v275 = vld [vmem:[#allocation5 + $0x3d0] sm:$0xff]
    %v276 = vld [vmem:[#allocation5 + $0x3d8] sm:$0xff]
    %v277 = vld [vmem:[#allocation5 + $0x3e0] sm:$0xff]
    %v278 = vld [vmem:[#allocation5 + $0x3e8] sm:$0xff]
    %v279 = vld [vmem:[#allocation5 + $0x3f0] sm:$0xff]
    %v280 = vld [vmem:[#allocation5 + $0x3f8] sm:$0xff]
    %v281 = vld [vmem:[#allocation5 + $0x400] sm:$0xff]
    %v282 = vld [vmem:[#allocation5 + $0x408] sm:$0xff]
    %v283 = vld [vmem:[#allocation5 + $0x410] sm:$0xff]
    %v284 = vld [vmem:[#allocation5 + $0x418] sm:$0xff]
    %v285 = vld [vmem:[#allocation5 + $0x420] sm:$0xff]
    %v286 = vld [vmem:[#allocation5 + $0x428] sm:$0xff]
    %v287 = vld [vmem:[#allocation5 + $0x430] sm:$0xff]
    %v288 = vld [vmem:[#allocation5 + $0x438] sm:$0xff]
    %v289 = vld [vmem:[#allocation5 + $0x440] sm:$0xff]
    %v290 = vld [vmem:[#allocation5 + $0x448] sm:$0xff]
    %v291 = vld [vmem:[#allocation5 + $0x450] sm:$0xff]
    %v292 = vld [vmem:[#allocation5 + $0x458] sm:$0xff]
    %v293 = vld [vmem:[#allocation5 + $0x460] sm:$0xff]
    %v294 = vld [vmem:[#allocation5 + $0x468] sm:$0xff]
    %v295 = vld [vmem:[#allocation5 + $0x470] sm:$0xff]
    %v296 = vld [vmem:[#allocation5 + $0x478] sm:$0xff]
    %v297 = vld [vmem:[#allocation5 + $0x480] sm:$0xff]
    %v298 = vld [vmem:[#allocation5 + $0x488] sm:$0xff]
    %v299 = vld [vmem:[#allocation5 + $0x490] sm:$0xff]
    %v300 = vld [vmem:[#allocation5 + $0x498] sm:$0xff]
    %v301 = vld [vmem:[#allocation5 + $0x4a0] sm:$0xff]
    %v302 = vld [vmem:[#allocation5 + $0x4a8] sm:$0xff]
    %v303 = vld [vmem:[#allocation5 + $0x4b0] sm:$0xff]
    %v304 = vld [vmem:[#allocation5 + $0x4b8] sm:$0xff]
    %v305 = vld [vmem:[#allocation5 + $0x4c0] sm:$0xff]
    %v306 = vld [vmem:[#allocation5 + $0x4c8] sm:$0xff]
    %v307 = vld [vmem:[#allocation5 + $0x4d0] sm:$0xff]
    %v308 = vld [vmem:[#allocation5 + $0x4d8] sm:$0xff]
    %v309 = vld [vmem:[#allocation5 + $0x4e0] sm:$0xff]
    %v310 = vld [vmem:[#allocation5 + $0x4e8] sm:$0xff]
    %v311 = vld [vmem:[#allocation5 + $0x4f0] sm:$0xff]
    %v312 = vld [vmem:[#allocation5 + $0x4f8] sm:$0xff]
    %v313 = vld [vmem:[#allocation5 + $0x500] sm:$0xff]
    %v314 = vld [vmem:[#allocation5 + $0x508] sm:$0xff]
    %v315 = vld [vmem:[#allocation5 + $0x510] sm:$0xff]
    %v316 = vld [vmem:[#allocation5 + $0x518] sm:$0xff]
    %v317 = vld [vmem:[#allocation5 + $0x520] sm:$0xff]
    %v318 = vld [vmem:[#allocation5 + $0x528] sm:$0xff]
    %v319 = vld [vmem:[#allocation5 + $0x530] sm:$0xff]
    %v320 = vld [vmem:[#allocation5 + $0x538] sm:$0xff]
    %v321 = vld [vmem:[#allocation5 + $0x540] sm:$0xff]
    %v322 = vld [vmem:[#allocation5 + $0x548] sm:$0xff]
    %v323 = vld [vmem:[#allocation5 + $0x550] sm:$0xff]
    %v324 = vld [vmem:[#allocation5 + $0x558] sm:$0xff]
    %v325 = vld [vmem:[#allocation5 + $0x560] sm:$0xff]
    %v326 = vld [vmem:[#allocation5 + $0x568] sm:$0xff]
    %v327 = vld [vmem:[#allocation5 + $0x570] sm:$0xff]
    %v328 = vld [vmem:[#allocation5 + $0x578] sm:$0xff]
    %v329 = vld [vmem:[#allocation5 + $0x580] sm:$0xff]
    %v330 = vld [vmem:[#allocation5 + $0x588] sm:$0xff]
    %v331 = vld [vmem:[#allocation5 + $0x590] sm:$0xff]
    %v332 = vld [vmem:[#allocation5 + $0x598] sm:$0xff]
    %v333 = vld [vmem:[#allocation5 + $0x5a0] sm:$0xff]
    %v334 = vld [vmem:[#allocation5 + $0x5a8] sm:$0xff]
    %v335 = vld [vmem:[#allocation5 + $0x5b0] sm:$0xff]
    %v336 = vld [vmem:[#allocation5 + $0x5b8] sm:$0xff]
    %v337 = vld [vmem:[#allocation5 + $0x5c0] sm:$0xff]
    %v338 = vld [vmem:[#allocation5 + $0x5c8] sm:$0xff]
    %v339 = vld [vmem:[#allocation5 + $0x5d0] sm:$0xff]
    %v340 = vld [vmem:[#allocation5 + $0x5d8] sm:$0xff]
    %v341 = vld [vmem:[#allocation5 + $0x5e0] sm:$0xff]
    %v342 = vld [vmem:[#allocation5 + $0x5e8] sm:$0xff]
    %v343 = vld [vmem:[#allocation5 + $0x5f0] sm:$0xff]
    %v344 = vld [vmem:[#allocation5 + $0x5f8] sm:$0xff]
    %v345 = vld [vmem:[#allocation5 + $0x600] sm:$0xff]
    %v346 = vld [vmem:[#allocation5 + $0x608] sm:$0xff]
    %v347 = vld [vmem:[#allocation5 + $0x610] sm:$0xff]
    %v348 = vld [vmem:[#allocation5 + $0x618] sm:$0xff]
    %v349 = vld [vmem:[#allocation5 + $0x620] sm:$0xff]
    %v350 = vld [vmem:[#allocation5 + $0x628] sm:$0xff]
    %v351 = vld [vmem:[#allocation5 + $0x630] sm:$0xff]
    %v352 = vld [vmem:[#allocation5 + $0x638] sm:$0xff]
    %v353 = vld [vmem:[#allocation5 + $0x640] sm:$0xff]
    %v354 = vld [vmem:[#allocation5 + $0x648] sm:$0xff]
    %v355 = vld [vmem:[#allocation5 + $0x650] sm:$0xff]
    %v356 = vld [vmem:[#allocation5 + $0x658] sm:$0xff]
    %v357 = vld [vmem:[#allocation5 + $0x660] sm:$0xff]
    %v358 = vld [vmem:[#allocation5 + $0x668] sm:$0xff]
    %v359 = vld [vmem:[#allocation5 + $0x670] sm:$0xff]
    %v360 = vld [vmem:[#allocation5 + $0x678] sm:$0xff]
    %v361 = vld [vmem:[#allocation5 + $0x680] sm:$0xff]
    %v362 = vld [vmem:[#allocation5 + $0x688] sm:$0xff]
    %v363 = vld [vmem:[#allocation5 + $0x690] sm:$0xff]
    %v364 = vld [vmem:[#allocation5 + $0x698] sm:$0xff]
    %v365 = vld [vmem:[#allocation5 + $0x6a0] sm:$0xff]
    %v366 = vld [vmem:[#allocation5 + $0x6a8] sm:$0xff]
    %v367 = vld [vmem:[#allocation5 + $0x6b0] sm:$0xff]
    %v368 = vld [vmem:[#allocation5 + $0x6b8] sm:$0xff]
    %v369 = vld [vmem:[#allocation5 + $0x6c0] sm:$0xff]
    %v370 = vld [vmem:[#allocation5 + $0x6c8] sm:$0xff]
    %v371 = vld [vmem:[#allocation5 + $0x6d0] sm:$0xff]
    %v372 = vld [vmem:[#allocation5 + $0x6d8] sm:$0xff]
    %v373 = vld [vmem:[#allocation5 + $0x6e0] sm:$0xff]
    %v374 = vld [vmem:[#allocation5 + $0x6e8] sm:$0xff]
    %v375 = vld [vmem:[#allocation5 + $0x6f0] sm:$0xff]
    %v376 = vld [vmem:[#allocation5 + $0x6f8] sm:$0xff]
    %v377 = vld [vmem:[#allocation5 + $0x700] sm:$0xff]
    %v378 = vld [vmem:[#allocation5 + $0x708] sm:$0xff]
    %v379 = vld [vmem:[#allocation5 + $0x710] sm:$0xff]
    %v380 = vld [vmem:[#allocation5 + $0x718] sm:$0xff]
    %v381 = vld [vmem:[#allocation5 + $0x720] sm:$0xff]
    %v382 = vld [vmem:[#allocation5 + $0x728] sm:$0xff]
    %v383 = vld [vmem:[#allocation5 + $0x730] sm:$0xff]
    %v384 = vld [vmem:[#allocation5 + $0x738] sm:$0xff]
    %v385 = vld [vmem:[#allocation5 + $0x740] sm:$0xff]
    %v386 = vld [vmem:[#allocation5 + $0x748] sm:$0xff]
    %v387 = vld [vmem:[#allocation5 + $0x750] sm:$0xff]
    %v388 = vld [vmem:[#allocation5 + $0x758] sm:$0xff]
    %v389 = vld [vmem:[#allocation5 + $0x760] sm:$0xff]
    %v390 = vld [vmem:[#allocation5 + $0x768] sm:$0xff]
    %v391 = vld [vmem:[#allocation5 + $0x770] sm:$0xff]
    %v392 = vld [vmem:[#allocation5 + $0x778] sm:$0xff]
    %v393 = vld [vmem:[#allocation5 + $0x780] sm:$0xff]
    %v394 = vld [vmem:[#allocation5 + $0x788] sm:$0xff]
    %v395 = vld [vmem:[#allocation5 + $0x790] sm:$0xff]
    %v396 = vld [vmem:[#allocation5 + $0x798] sm:$0xff]
    %v397 = vld [vmem:[#allocation5 + $0x7a0] sm:$0xff]
    %v398 = vld [vmem:[#allocation5 + $0x7a8] sm:$0xff]
    %v399 = vld [vmem:[#allocation5 + $0x7b0] sm:$0xff]
    %v400 = vld [vmem:[#allocation5 + $0x7b8] sm:$0xff]
    %v401 = vld [vmem:[#allocation5 + $0x7c0] sm:$0xff]
    %v402 = vld [vmem:[#allocation5 + $0x7c8] sm:$0xff]
    %v403 = vld [vmem:[#allocation5 + $0x7d0] sm:$0xff]
    %v404 = vld [vmem:[#allocation5 + $0x7d8] sm:$0xff]
    %v405 = vld [vmem:[#allocation5 + $0x7e0] sm:$0xff]
    %v406 = vld [vmem:[#allocation5 + $0x7e8] sm:$0xff]
    %v407 = vld [vmem:[#allocation5 + $0x7f0] sm:$0xff]
    %v408 = vld [vmem:[#allocation5 + $0x7f8] sm:$0xff]
    %v409 = vld [vmem:[#allocation7] sm:$0xf]
    %v411 = vperm.slane %v409, 0
    %v412 = vperm.slane %v409, 1
    %v413 = vperm.slane %v409, 2
    %v414 = vperm.slane %v409, 3
    %419 = vmatpush.msra.mxu0 %v213
    %420 = vmatpush.msra.mxu0 %v209
    %421 = vmatpush.msra.mxu0 %v205
    %422 = vmatpush.msra.mxu0 %v201
    %423 = vmatpush.msra.mxu0 %v197
    %424 = vmatpush.msra.mxu0 %v193
    %425 = vmatpush.msra.mxu0 %v189
    %426 = vmatpush.msra.mxu0 %v185
    %427 = vmatpush.msra.mxu0 %v181
    %428 = vmatpush.msra.mxu0 %v177
    %429 = vmatpush.msra.mxu0 %v173
    %430 = vmatpush.msra.mxu0 %v169
    %431 = vmatpush.msra.mxu0 %v165
    %432 = vmatpush.msra.mxu0 %v161
    %433 = vmatpush.msra.mxu0 %v157
    %434 = vmatpush.msra.mxu0 %v153
    %435 = vmatmul.f32.gmra.mxu0 %v149
    %v436 = vpop.f32.mrf.mxu0
    %v437 = vadd.f32 %v411, %v436
    %438 = vdwg.mxu0
    %439 = vmatpush.msra.mxu0 %v277
    %440 = vmatpush.msra.mxu0 %v273
    %441 = vmatpush.msra.mxu0 %v269
    %442 = vmatpush.msra.mxu0 %v265
    %443 = vmatpush.msra.mxu0 %v261
    %444 = vmatpush.msra.mxu0 %v257
    %445 = vmatpush.msra.mxu0 %v253
    %446 = vmatpush.msra.mxu0 %v249
    %447 = vmatpush.msra.mxu0 %v245
    %448 = vmatpush.msra.mxu0 %v241
    %449 = vmatpush.msra.mxu0 %v237
    %450 = vmatpush.msra.mxu0 %v233
    %451 = vmatpush.msra.mxu0 %v229
    %452 = vmatpush.msra.mxu0 %v225
    %453 = vmatpush.msra.mxu0 %v221
    %454 = vmatpush.msra.mxu0 %v217
    %455 = vmatmul.f32.gmra.mxu0 %v150
    %v456 = vpop.f32.mrf.mxu0
    %v457 = vadd.f32 %v437, %v456
    %458 = vdwg.mxu0
    %459 = vmatpush.msra.mxu0 %v341
    %460 = vmatpush.msra.mxu0 %v337
    %461 = vmatpush.msra.mxu0 %v333
    %462 = vmatpush.msra.mxu0 %v329
    %463 = vmatpush.msra.mxu0 %v325
    %464 = vmatpush.msra.mxu0 %v321
    %465 = vmatpush.msra.mxu0 %v317
    %466 = vmatpush.msra.mxu0 %v313
    %467 = vmatpush.msra.mxu0 %v309
    %468 = vmatpush.msra.mxu0 %v305
    %469 = vmatpush.msra.mxu0 %v301
    %470 = vmatpush.msra.mxu0 %v297
    %471 = vmatpush.msra.mxu0 %v293
    %472 = vmatpush.msra.mxu0 %v289
    %473 = vmatpush.msra.mxu0 %v285
    %474 = vmatpush.msra.mxu0 %v281
    %475 = vmatmul.f32.gmra.mxu0 %v151
    %v476 = vpop.f32.mrf.mxu0
    %v477 = vadd.f32 %v457, %v476
    %478 = vdwg.mxu0
    %479 = vmatpush.msra.mxu0 %v405
    %480 = vmatpush.msra.mxu0 %v401
    %481 = vmatpush.msra.mxu0 %v397
    %482 = vmatpush.msra.mxu0 %v393
    %483 = vmatpush.msra.mxu0 %v389
    %484 = vmatpush.msra.mxu0 %v385
    %485 = vmatpush.msra.mxu0 %v381
    %486 = vmatpush.msra.mxu0 %v377
    %487 = vmatpush.msra.mxu0 %v373
    %488 = vmatpush.msra.mxu0 %v369
    %489 = vmatpush.msra.mxu0 %v365
    %490 = vmatpush.msra.mxu0 %v361
    %491 = vmatpush.msra.mxu0 %v357
    %492 = vmatpush.msra.mxu0 %v353
    %493 = vmatpush.msra.mxu0 %v349
    %494 = vmatpush.msra.mxu0 %v345
    %495 = vmatmul.f32.gmra.mxu0 %v152
    %v496 = vpop.f32.mrf.mxu0
    %v497 = vadd.f32 %v477, %v496
    %498 = vdwg.mxu0
    %499 = vmatpush.msra.mxu0 %v214
    %500 = vmatpush.msra.mxu0 %v210
    %501 = vmatpush.msra.mxu0 %v206
    %502 = vmatpush.msra.mxu0 %v202
    %503 = vmatpush.msra.mxu0 %v198
    %504 = vmatpush.msra.mxu0 %v194
    %505 = vmatpush.msra.mxu0 %v190
    %506 = vmatpush.msra.mxu0 %v186
    %507 = vmatpush.msra.mxu0 %v182
    %508 = vmatpush.msra.mxu0 %v178
    %509 = vmatpush.msra.mxu0 %v174
    %510 = vmatpush.msra.mxu0 %v170
    %511 = vmatpush.msra.mxu0 %v166
    %512 = vmatpush.msra.mxu0 %v162
    %513 = vmatpush.msra.mxu0 %v158
    %514 = vmatpush.msra.mxu0 %v154
    %515 = vmatmul.f32.gmra.mxu0 %v149
    %v516 = vpop.f32.mrf.mxu0
    %v517 = vadd.f32 %v412, %v516
    %518 = vdwg.mxu0
    %519 = vmatpush.msra.mxu0 %v278
    %520 = vmatpush.msra.mxu0 %v274
    %521 = vmatpush.msra.mxu0 %v270
    %522 = vmatpush.msra.mxu0 %v266
    %523 = vmatpush.msra.mxu0 %v262
    %524 = vmatpush.msra.mxu0 %v258
    %525 = vmatpush.msra.mxu0 %v254
    %526 = vmatpush.msra.mxu0 %v250
    %527 = vmatpush.msra.mxu0 %v246
    %528 = vmatpush.msra.mxu0 %v242
    %529 = vmatpush.msra.mxu0 %v238
    %530 = vmatpush.msra.mxu0 %v234
    %531 = vmatpush.msra.mxu0 %v230
    %532 = vmatpush.msra.mxu0 %v226
    %533 = vmatpush.msra.mxu0 %v222
    %534 = vmatpush.msra.mxu0 %v218
    %535 = vmatmul.f32.gmra.mxu0 %v150
    %v536 = vpop.f32.mrf.mxu0
    %v537 = vadd.f32 %v517, %v536
    %538 = vdwg.mxu0
    %539 = vmatpush.msra.mxu0 %v342
    %540 = vmatpush.msra.mxu0 %v338
    %541 = vmatpush.msra.mxu0 %v334
    %542 = vmatpush.msra.mxu0 %v330
    %543 = vmatpush.msra.mxu0 %v326
    %544 = vmatpush.msra.mxu0 %v322
    %545 = vmatpush.msra.mxu0 %v318
    %546 = vmatpush.msra.mxu0 %v314
    %547 = vmatpush.msra.mxu0 %v310
    %548 = vmatpush.msra.mxu0 %v306
    %549 = vmatpush.msra.mxu0 %v302
    %550 = vmatpush.msra.mxu0 %v298
    %551 = vmatpush.msra.mxu0 %v294
    %552 = vmatpush.msra.mxu0 %v290
    %553 = vmatpush.msra.mxu0 %v286
    %554 = vmatpush.msra.mxu0 %v282
    %555 = vmatmul.f32.gmra.mxu0 %v151
    %v556 = vpop.f32.mrf.mxu0
    %v557 = vadd.f32 %v537, %v556
    %558 = vdwg.mxu0
    %559 = vmatpush.msra.mxu0 %v406
    %560 = vmatpush.msra.mxu0 %v402
    %561 = vmatpush.msra.mxu0 %v398
    %562 = vmatpush.msra.mxu0 %v394
    %563 = vmatpush.msra.mxu0 %v390
    %564 = vmatpush.msra.mxu0 %v386
    %565 = vmatpush.msra.mxu0 %v382
    %566 = vmatpush.msra.mxu0 %v378
    %567 = vmatpush.msra.mxu0 %v374
    %568 = vmatpush.msra.mxu0 %v370
    %569 = vmatpush.msra.mxu0 %v366
    %570 = vmatpush.msra.mxu0 %v362
    %571 = vmatpush.msra.mxu0 %v358
    %572 = vmatpush.msra.mxu0 %v354
    %573 = vmatpush.msra.mxu0 %v350
    %574 = vmatpush.msra.mxu0 %v346
    %575 = vmatmul.f32.gmra.mxu0 %v152
    %v576 = vpop.f32.mrf.mxu0
    %v577 = vadd.f32 %v557, %v576
    %578 = vdwg.mxu0
    %579 = vmatpush.msra.mxu0 %v215
    %580 = vmatpush.msra.mxu0 %v211
    %581 = vmatpush.msra.mxu0 %v207
    %582 = vmatpush.msra.mxu0 %v203
    %583 = vmatpush.msra.mxu0 %v199
    %584 = vmatpush.msra.mxu0 %v195
    %585 = vmatpush.msra.mxu0 %v191
    %586 = vmatpush.msra.mxu0 %v187
    %587 = vmatpush.msra.mxu0 %v183
    %588 = vmatpush.msra.mxu0 %v179
    %589 = vmatpush.msra.mxu0 %v175
    %590 = vmatpush.msra.mxu0 %v171
    %591 = vmatpush.msra.mxu0 %v167
    %592 = vmatpush.msra.mxu0 %v163
    %593 = vmatpush.msra.mxu0 %v159
    %594 = vmatpush.msra.mxu0 %v155
    %595 = vmatmul.f32.gmra.mxu0 %v149
    %v596 = vpop.f32.mrf.mxu0
    %v597 = vadd.f32 %v413, %v596
    %598 = vdwg.mxu0
    %599 = vmatpush.msra.mxu0 %v279
    %600 = vmatpush.msra.mxu0 %v275
    %601 = vmatpush.msra.mxu0 %v271
    %602 = vmatpush.msra.mxu0 %v267
    %603 = vmatpush.msra.mxu0 %v263
    %604 = vmatpush.msra.mxu0 %v259
    %605 = vmatpush.msra.mxu0 %v255
    %606 = vmatpush.msra.mxu0 %v251
    %607 = vmatpush.msra.mxu0 %v247
    %608 = vmatpush.msra.mxu0 %v243
    %609 = vmatpush.msra.mxu0 %v239
    %610 = vmatpush.msra.mxu0 %v235
    %611 = vmatpush.msra.mxu0 %v231
    %612 = vmatpush.msra.mxu0 %v227
    %613 = vmatpush.msra.mxu0 %v223
    %614 = vmatpush.msra.mxu0 %v219
    %615 = vmatmul.f32.gmra.mxu0 %v150
    %v616 = vpop.f32.mrf.mxu0
    %v617 = vadd.f32 %v597, %v616
    %618 = vdwg.mxu0
    %619 = vmatpush.msra.mxu0 %v343
    %620 = vmatpush.msra.mxu0 %v339
    %621 = vmatpush.msra.mxu0 %v335
    %622 = vmatpush.msra.mxu0 %v331
    %623 = vmatpush.msra.mxu0 %v327
    %624 = vmatpush.msra.mxu0 %v323
    %625 = vmatpush.msra.mxu0 %v319
    %626 = vmatpush.msra.mxu0 %v315
    %627 = vmatpush.msra.mxu0 %v311
    %628 = vmatpush.msra.mxu0 %v307
    %629 = vmatpush.msra.mxu0 %v303
    %630 = vmatpush.msra.mxu0 %v299
    %631 = vmatpush.msra.mxu0 %v295
    %632 = vmatpush.msra.mxu0 %v291
    %633 = vmatpush.msra.mxu0 %v287
    %634 = vmatpush.msra.mxu0 %v283
    %635 = vmatmul.f32.gmra.mxu0 %v151
    %v636 = vpop.f32.mrf.mxu0
    %v637 = vadd.f32 %v617, %v636
    %638 = vdwg.mxu0
    %639 = vmatpush.msra.mxu0 %v407
    %640 = vmatpush.msra.mxu0 %v403
    %641 = vmatpush.msra.mxu0 %v399
    %642 = vmatpush.msra.mxu0 %v395
    %643 = vmatpush.msra.mxu0 %v391
    %644 = vmatpush.msra.mxu0 %v387
    %645 = vmatpush.msra.mxu0 %v383
    %646 = vmatpush.msra.mxu0 %v379
    %647 = vmatpush.msra.mxu0 %v375
    %648 = vmatpush.msra.mxu0 %v371
    %649 = vmatpush.msra.mxu0 %v367
    %650 = vmatpush.msra.mxu0 %v363
    %651 = vmatpush.msra.mxu0 %v359
    %652 = vmatpush.msra.mxu0 %v355
    %653 = vmatpush.msra.mxu0 %v351
    %654 = vmatpush.msra.mxu0 %v347
    %655 = vmatmul.f32.gmra.mxu0 %v152
    %v656 = vpop.f32.mrf.mxu0
    %v657 = vadd.f32 %v637, %v656
    %658 = vdwg.mxu0
    %659 = vmatpush.msra.mxu0 %v216
    %660 = vmatpush.msra.mxu0 %v212
    %661 = vmatpush.msra.mxu0 %v208
    %662 = vmatpush.msra.mxu0 %v204
    %663 = vmatpush.msra.mxu0 %v200
    %664 = vmatpush.msra.mxu0 %v196
    %665 = vmatpush.msra.mxu0 %v192
    %666 = vmatpush.msra.mxu0 %v188
    %667 = vmatpush.msra.mxu0 %v184
    %668 = vmatpush.msra.mxu0 %v180
    %669 = vmatpush.msra.mxu0 %v176
    %670 = vmatpush.msra.mxu0 %v172
    %671 = vmatpush.msra.mxu0 %v168
    %672 = vmatpush.msra.mxu0 %v164
    %673 = vmatpush.msra.mxu0 %v160
    %674 = vmatpush.msra.mxu0 %v156
    %675 = vmatmul.f32.gmra.mxu0 %v149
    %v676 = vpop.f32.mrf.mxu0
    %v677 = vadd.f32 %v414, %v676
    %678 = vdwg.mxu0
    %679 = vmatpush.msra.mxu0 %v280
    %680 = vmatpush.msra.mxu0 %v276
    %681 = vmatpush.msra.mxu0 %v272
    %682 = vmatpush.msra.mxu0 %v268
    %683 = vmatpush.msra.mxu0 %v264
    %684 = vmatpush.msra.mxu0 %v260
    %685 = vmatpush.msra.mxu0 %v256
    %686 = vmatpush.msra.mxu0 %v252
    %687 = vmatpush.msra.mxu0 %v248
    %688 = vmatpush.msra.mxu0 %v244
    %689 = vmatpush.msra.mxu0 %v240
    %690 = vmatpush.msra.mxu0 %v236
    %691 = vmatpush.msra.mxu0 %v232
    %692 = vmatpush.msra.mxu0 %v228
    %693 = vmatpush.msra.mxu0 %v224
    %694 = vmatpush.msra.mxu0 %v220
    %695 = vmatmul.f32.gmra.mxu0 %v150
    %v696 = vpop.f32.mrf.mxu0
    %v697 = vadd.f32 %v677, %v696
    %698 = vdwg.mxu0
    %699 = vmatpush.msra.mxu0 %v344
    %700 = vmatpush.msra.mxu0 %v340
    %701 = vmatpush.msra.mxu0 %v336
    %702 = vmatpush.msra.mxu0 %v332
    %703 = vmatpush.msra.mxu0 %v328
    %704 = vmatpush.msra.mxu0 %v324
    %705 = vmatpush.msra.mxu0 %v320
    %706 = vmatpush.msra.mxu0 %v316
    %707 = vmatpush.msra.mxu0 %v312
    %708 = vmatpush.msra.mxu0 %v308
    %709 = vmatpush.msra.mxu0 %v304
    %710 = vmatpush.msra.mxu0 %v300
    %711 = vmatpush.msra.mxu0 %v296
    %712 = vmatpush.msra.mxu0 %v292
    %713 = vmatpush.msra.mxu0 %v288
    %714 = vmatpush.msra.mxu0 %v284
    %715 = vmatmul.f32.gmra.mxu0 %v151
    %v716 = vpop.f32.mrf.mxu0
    %v717 = vadd.f32 %v697, %v716
    %718 = vdwg.mxu0
    %719 = vmatpush.msra.mxu0 %v408
    %720 = vmatpush.msra.mxu0 %v404
    %721 = vmatpush.msra.mxu0 %v400
    %722 = vmatpush.msra.mxu0 %v396
    %723 = vmatpush.msra.mxu0 %v392
    %724 = vmatpush.msra.mxu0 %v388
    %725 = vmatpush.msra.mxu0 %v384
    %726 = vmatpush.msra.mxu0 %v380
    %727 = vmatpush.msra.mxu0 %v376
    %728 = vmatpush.msra.mxu0 %v372
    %729 = vmatpush.msra.mxu0 %v368
    %730 = vmatpush.msra.mxu0 %v364
    %731 = vmatpush.msra.mxu0 %v360
    %732 = vmatpush.msra.mxu0 %v356
    %733 = vmatpush.msra.mxu0 %v352
    %734 = vmatpush.msra.mxu0 %v348
    %735 = vmatmul.f32.gmra.mxu0 %v152
    %v736 = vpop.f32.mrf.mxu0
    %v737 = vadd.f32 %v717, %v736
    %738 = vdwg.mxu0
    %vm739 = vcmp.gt.f32.partialorder %v497, 0.0
    %vm740 = vcmp.gt.f32.partialorder %v577, 0.0
    %vm741 = vcmp.gt.f32.partialorder %v657, 0.0
    %vm742 = vcmp.gt.f32.partialorder %v737, 0.0
    %v743 = vmul.f32 %v497, 1.442695
    %v744 = vpow.pop %v743
    %v745 = vmul.f32 %v577, 1.442695
    %v746 = vpow.pop %v745
    %v747 = vmul.f32 %v657, 1.442695
    %v748 = vpow.pop %v747
    %v749 = vmul.f32 %v737, 1.442695
    %v750 = vpow.pop %v749
    %v751 = vsub.f32 %v744, 1.0
    %v752 = vsub.f32 %v746, 1.0
    %v753 = vsub.f32 %v748, 1.0
    %v754 = vsub.f32 %v750, 1.0
    %v755 = vsel %vm739, %v497, %v751
    %v756 = vsel %vm740, %v577, %v752
    %v757 = vsel %vm741, %v657, %v753
    %v758 = vsel %vm742, %v737, %v754
    %v759 = vld [vmem:[%s5] sm:$0xf]
    %v761 = vperm.slane %v759, 0
    %v762 = vperm.slane %v759, 1
    %v763 = vperm.slane %v759, 2
    %v764 = vperm.slane %v759, 3
    %v769 = vmul.f32 %v755, %v761
    %v770 = vmul.f32 %v756, %v762
    %v771 = vmul.f32 %v757, %v763
    %v772 = vmul.f32 %v758, %v764
    %v773 = vadd.f32 %v769, %v770
    %v774 = vadd.f32 %v773, %v771
    %v775 = vadd.f32 %v774, %v772
    %776 = vadd.xlane.f32.xlu0 %v775
    %v777 = vpop.xlane.xlu0 %776
    %v778 = vld [vmem:[#allocation2] sm:$0x1]
    %v780 = vperm.slane %v778, 0
    %v782 = vadd.f32 %v777, %v780
    %vm783 = vcmask 7168
    %784 = vst.msk [vmem:[%s7] sm:$0xff] %vm783, %v782
    // Predicated region
    $region42: #{tpu_custom_call.1} parent=1 // pred_check
      _
    $region43: #{tpu_custom_call.1} parent=1 // pred_check_branch
      %786 = sbr.rel (0) target = $region45
    $region44: #{tpu_custom_call.1} parent=1 // pred_region
      _
    $region45: #{tpu_custom_call.1} parent=1 // pred_fallthru
      _
    // Predicated region
    $region46: #{tpu_custom_call.1} parent=1 // pred_check
      _
    $region47: #{tpu_custom_call.1} parent=1 // pred_check_branch
      %788 = sbr.rel (0) target = $region49
    $region48: #{tpu_custom_call.1} parent=1 // pred_region
      _
    $region49: #{tpu_custom_call.1} parent=1 // pred_fallthru
      _
    %789 = vsyncpa [#allocation4], 1
    %790 = vsyncpa [#allocation6], 1

</llo_original>
